<compile_context>
chip_gen: v5e
topology: v5e:2x2
jax: 0.10.0
libtpu: 0.0.40
codegen_flags: <defaults>
</compile_context>

<pallas_src>
import functools

import jax
import jax.numpy as jnp
from jax.experimental import pallas as pl
from jax.experimental.pallas import tpu as pltpu


def _compress_ce_kernel(n_rows, n_cols, tile_n, tile_c,
                        logits_ref, target_ref, ce_ref,
                        m_sc, l_sc, picked_sc, acc_sc):
    i = pl.program_id(0)          # row-tile index
    j = pl.program_id(1)          # class-tile index (reduction, innermost)
    ni = pl.num_programs(0)
    nj = pl.num_programs(1)

    # ---- global accumulator init (very first grid step) ----
    @pl.when((i == 0) & (j == 0))
    def _():
        acc_sc[...] = jnp.zeros_like(acc_sc)

    # ---- reset per-row online-logsumexp state at the start of each row tile ----
    @pl.when(j == 0)
    def _():
        m_sc[...] = jnp.full(m_sc.shape, -jnp.inf, jnp.float32)
        l_sc[...] = jnp.zeros(l_sc.shape, jnp.float32)
        picked_sc[...] = jnp.zeros(picked_sc.shape, jnp.float32)

    x = logits_ref[...].astype(jnp.float32)                 # (tile_n, tile_c)
    t = target_ref[...]                                     # (tile_n, 1) int32

    # Global class index of each lane in this tile; mask padded columns.
    col = jax.lax.broadcasted_iota(jnp.int32, x.shape, 1) + j * tile_c
    x = jnp.where(col < n_cols, x, -jnp.inf)

    # Online logsumexp update.
    m_prev = m_sc[...]                                      # (tile_n, 1)
    m_new = jnp.maximum(m_prev, jnp.max(x, axis=-1, keepdims=True))
    alpha = jnp.exp(m_prev - m_new)
    p = jnp.exp(x - m_new)                                  # masked cols -> exp(-inf) = 0
    l_sc[...] = alpha * l_sc[...] + jnp.sum(p, axis=-1, keepdims=True)
    m_sc[...] = m_new

    # Pick the logit at the target class: VPU select + XLU lane reduce (no MXU).
    picked_sc[...] += jnp.sum(jnp.where(col == t, x, 0.0), axis=-1, keepdims=True)

    # ---- finalize this row tile: accumulate masked NLL sum ----
    @pl.when(j == nj - 1)
    def _():
        lse = m_sc[...] + jnp.log(l_sc[...])                # (tile_n, 1)
        nll = lse - picked_sc[...]
        row = jax.lax.broadcasted_iota(jnp.int32, nll.shape, 0) + i * tile_n
        nll = jnp.where(row < n_rows, nll, 0.0)             # drop padded rows
        acc_sc[...] += jnp.sum(nll)

    # ---- last grid step: write the mean ----
    @pl.when((i == ni - 1) & (j == nj - 1))
    def _():
        ce_ref[...] = acc_sc[...] / jnp.float32(n_rows)


def _default_tiles(n, c, itemsize):
    # Lane-dense class tile: full C when modest, else a 128-multiple chunk
    # handled by the online logsumexp.
    if c <= 4096:
        tile_c = c
    else:
        tile_c = 2048
    # Keep one logits tile around ~4 MiB so the double-buffered pipeline fits
    # comfortably in the scoped VMEM of every generation (16 MiB v5e default,
    # 32 MiB v6e/v7x scoped, 64 MiB v7x physical).
    budget = 4 * 1024 * 1024
    rows = max(16, (budget // max(1, tile_c * itemsize)) // 16 * 16)
    if n <= rows:
        tile_n = n                    # full dim: always a legal block shape
    else:
        tile_n = rows                 # multiple of 16; padded rows are masked
    return tile_n, tile_c


def compress_loss(logits, target, model_snr, lmbda, *, tile_n=None, tile_c=None):
    """CompressLoss forward.

    logits: (N, C) float32 or bfloat16; target: (N,) integer class ids;
    model_snr: scalar.  Returns (totalLoss, crossEntropyLoss, compressLoss).
    """
    n, c = logits.shape
    dflt_n, dflt_c = _default_tiles(n, c, jnp.dtype(logits.dtype).itemsize)
    tile_n = dflt_n if tile_n is None else tile_n
    tile_c = dflt_c if tile_c is None else tile_c

    target2d = target.astype(jnp.int32).reshape(n, 1)
    grid = (pl.cdiv(n, tile_n), pl.cdiv(c, tile_c))

    kernel = functools.partial(_compress_ce_kernel, n, c, tile_n, tile_c)

    ce = pl.pallas_call(
        kernel,
        out_shape=jax.ShapeDtypeStruct((1, 1), jnp.float32),
        grid_spec=pltpu.PrefetchScalarGridSpec(
            num_scalar_prefetch=0,
            grid=grid,
            in_specs=[
                pl.BlockSpec((tile_n, tile_c), lambda i, j: (i, j)),  # logits
                pl.BlockSpec((tile_n, 1), lambda i, j: (i, 0)),       # targets
            ],
            out_specs=pl.BlockSpec((1, 1), lambda i, j: (0, 0)),      # ce (VMEM)
            scratch_shapes=[
                pltpu.VMEM((tile_n, 1), jnp.float32),   # running max m
                pltpu.VMEM((tile_n, 1), jnp.float32),   # running exp-sum l
                pltpu.VMEM((tile_n, 1), jnp.float32),   # picked target logit
                pltpu.VMEM((1, 1), jnp.float32),        # global nll sum
            ],
        ),
        compiler_params=pltpu.CompilerParams(
            # Both grid axes feed one shared scalar accumulator -> reductions.
            dimension_semantics=("arbitrary", "arbitrary"),
        ),
    )(logits, target2d)

    ce = ce.reshape(())
    snr = jnp.asarray(model_snr, jnp.float32).reshape(())
    comp = jnp.float32(lmbda) * (jnp.float32(1.0) / snr)
    total = ce + comp
    return total, ce, comp


def _reference(logits, target, model_snr, lmbda):
    logp = jax.nn.log_softmax(logits.astype(jnp.float32), axis=-1)
    nll = -jnp.take_along_axis(logp, target[:, None].astype(jnp.int32), axis=-1)
    ce = jnp.mean(nll)
    comp = jnp.float32(lmbda) * (1.0 / jnp.float32(model_snr))
    return ce + comp, ce, comp


if __name__ == "__main__":
    key = jax.random.PRNGKey(0)
    lmbda = 0.5
    model_snr = 10.0

    # --- test 1: small single-tile case (batch=8 samples, 32 classes) ---
    k1, k2 = jax.random.split(key)
    N, C = 8, 32
    logits = jax.random.normal(k1, (N, C), dtype=jnp.float32)
    target = jax.random.randint(k2, (N,), 0, C, dtype=jnp.int32)

    total, ce, comp = compress_loss(logits, target, model_snr, lmbda)
    jax.block_until_ready((total, ce, comp))
    rt, rc, rp = _reference(logits, target, model_snr, lmbda)
    assert jnp.allclose(total, rt, rtol=1e-5, atol=1e-5)
    assert jnp.allclose(ce, rc, rtol=1e-5, atol=1e-5)
    assert jnp.allclose(comp, rp, rtol=1e-5, atol=1e-5)

    # --- test 2: ragged shapes with forced small tiles -> exercises the 2-D
    #             grid, online logsumexp over C, and row/column padding masks ---
    k3, k4 = jax.random.split(k1)
    N2, C2 = 37, 300
    logits2 = jax.random.normal(k3, (N2, C2), dtype=jnp.float32)
    target2 = jax.random.randint(k4, (N2,), 0, C2, dtype=jnp.int32)

    total2, ce2, comp2 = compress_loss(logits2, target2, model_snr, lmbda,
                                       tile_n=16, tile_c=128)
    jax.block_until_ready((total2, ce2, comp2))
    rt2, rc2, rp2 = _reference(logits2, target2, model_snr, lmbda)
    assert jnp.allclose(total2, rt2, rtol=1e-5, atol=1e-5)
    assert jnp.allclose(ce2, rc2, rtol=1e-5, atol=1e-5)
    assert jnp.allclose(comp2, rp2, rtol=1e-5, atol=1e-5)

    # --- test 3: bf16 logits (half the HBM bytes; f32 accumulation inside) ---
    logits3 = logits2.astype(jnp.bfloat16)
    total3, ce3, comp3 = compress_loss(logits3, target2, model_snr, lmbda,
                                       tile_n=16, tile_c=128)
    jax.block_until_ready((total3, ce3, comp3))
    rt3, rc3, rp3 = _reference(logits3.astype(jnp.float32), target2,
                               model_snr, lmbda)
    assert jnp.allclose(total3, rt3, rtol=1e-4, atol=1e-4)
    assert jnp.allclose(ce3, rc3, rtol=1e-4, atol=1e-4)

    print("KERNEL_OK")
</pallas_src>

<mosaic_0001>
module attributes {stable_mosaic.version = 11 : i64} {
  func.func @_compress_ce_kernel(%arg0: i32, %arg1: i32, %arg2: memref<8x32xf32, #tpu.memory_space<vmem>>, %arg3: memref<8x1xi32, #tpu.memory_space<vmem>>, %arg4: memref<1x1xf32, #tpu.memory_space<vmem>>, %arg5: memref<8x1xf32, #tpu.memory_space<vmem>>, %arg6: memref<8x1xf32, #tpu.memory_space<vmem>>, %arg7: memref<8x1xf32, #tpu.memory_space<vmem>>, %arg8: memref<1x1xf32, #tpu.memory_space<vmem>>) attributes {dimension_semantics = [#tpu.dimension_semantics<arbitrary>, #tpu.dimension_semantics<arbitrary>], iteration_bounds = array<i64: 1, 1>, scalar_prefetch = 0 : i64, scratch_operands = 4 : i64, tpu.core_type = #tpu.core_type<tc>, window_params = [{transform_indices = @transform_0, window_bounds = array<i64: 8, 32>}, {transform_indices = @transform_1, window_bounds = array<i64: 8, 1>}, {pipeline_mode = #tpu.pipeline_mode<synchronous>, transform_indices = @transform_2, window_bounds = array<i64: 1, 1>}]} {
    %c0_i32 = arith.constant 0 : i32
    %0 = arith.cmpi eq, %arg0, %c0_i32 : i32
    %c0_i32_0 = arith.constant 0 : i32
    %1 = arith.cmpi eq, %arg1, %c0_i32_0 : i32
    %2 = arith.andi %0, %1 : i1
    %3 = arith.extui %2 : i1 to i32
    %c0_i32_1 = arith.constant 0 : i32
    %4 = arith.cmpi ne, %3, %c0_i32_1 : i32
    scf.if %4 {
      %cst_29 = arith.constant 0.000000e+00 : f32
      %51 = vector.broadcast %cst_29 : f32 to vector<1x1xf32>
      %c0_30 = arith.constant 0 : index
      %c0_31 = arith.constant 0 : index
      %52 = vector.load %arg8[%c0_30, %c0_31] : memref<1x1xf32, #tpu.memory_space<vmem>>, vector<1x1xf32>
      tpu.vector_store %arg8[%c0_30, %c0_31], %51 {strides = array<i32>} : memref<1x1xf32, #tpu.memory_space<vmem>>, vector<1x1xf32>,
    } else {
    }
    %c0_i32_2 = arith.constant 0 : i32
    %5 = arith.cmpi eq, %arg1, %c0_i32_2 : i32
    %6 = arith.extui %5 : i1 to i32
    %c0_i32_3 = arith.constant 0 : i32
    %7 = arith.cmpi ne, %6, %c0_i32_3 : i32
    scf.if %7 {
      %cst_29 = arith.constant 0xFF800000 : f32
      %51 = vector.broadcast %cst_29 : f32 to vector<8x1xf32>
      %c0_30 = arith.constant 0 : index
      %c0_31 = arith.constant 0 : index
      %52 = vector.load %arg5[%c0_30, %c0_31] : memref<8x1xf32, #tpu.memory_space<vmem>>, vector<8x1xf32>
      tpu.vector_store %arg5[%c0_30, %c0_31], %51 {strides = array<i32>} : memref<8x1xf32, #tpu.memory_space<vmem>>, vector<8x1xf32>,
      %cst_32 = arith.constant 0.000000e+00 : f32
      %53 = vector.broadcast %cst_32 : f32 to vector<8x1xf32>
      %c0_33 = arith.constant 0 : index
      %c0_34 = arith.constant 0 : index
      %54 = vector.load %arg6[%c0_33, %c0_34] : memref<8x1xf32, #tpu.memory_space<vmem>>, vector<8x1xf32>
      tpu.vector_store %arg6[%c0_33, %c0_34], %53 {strides = array<i32>} : memref<8x1xf32, #tpu.memory_space<vmem>>, vector<8x1xf32>,
      %cst_35 = arith.constant 0.000000e+00 : f32
      %55 = vector.broadcast %cst_35 : f32 to vector<8x1xf32>
      %c0_36 = arith.constant 0 : index
      %c0_37 = arith.constant 0 : index
      %56 = vector.load %arg7[%c0_36, %c0_37] : memref<8x1xf32, #tpu.memory_space<vmem>>, vector<8x1xf32>
      tpu.vector_store %arg7[%c0_36, %c0_37], %55 {strides = array<i32>} : memref<8x1xf32, #tpu.memory_space<vmem>>, vector<8x1xf32>,
    } else {
    }
    %c0 = arith.constant 0 : index
    %c0_4 = arith.constant 0 : index
    %8 = vector.load %arg2[%c0, %c0_4] : memref<8x32xf32, #tpu.memory_space<vmem>>, vector<8x32xf32>
    %c0_5 = arith.constant 0 : index
    %c0_6 = arith.constant 0 : index
    %9 = vector.load %arg3[%c0_5, %c0_6] : memref<8x1xi32, #tpu.memory_space<vmem>>, vector<8x1xi32>
    %10 = tpu.iota {dimensions = array<i32: 1>} : vector<8x32xi32>
    %c32_i32 = arith.constant 32 : i32
    %11 = arith.muli %arg1, %c32_i32 : i32
    %12 = vector.broadcast %11 : i32 to vector<8x32xi32>
    %13 = arith.addi %10, %12 : vector<8x32xi32>
    %c32_i32_7 = arith.constant 32 : i32
    %14 = vector.broadcast %c32_i32_7 : i32 to vector<8x32xi32>
    %15 = arith.cmpi slt, %13, %14 : vector<8x32xi32>
    %cst = arith.constant 0xFF800000 : f32
    %16 = vector.broadcast %cst : f32 to vector<8x32xf32>
    %17 = arith.select %15, %8, %16 : vector<8x32xi1>, vector<8x32xf32>
    %c0_8 = arith.constant 0 : index
    %c0_9 = arith.constant 0 : index
    %18 = vector.load %arg5[%c0_8, %c0_9] : memref<8x1xf32, #tpu.memory_space<vmem>>, vector<8x1xf32>
    %cst_10 = arith.constant dense<0xFF800000> : vector<8xf32>
    %19 = vector.multi_reduction <maximumf>, %17, %cst_10 [1] : vector<8x32xf32> to vector<8xf32>
    %20 = vector.shape_cast %19 : vector<8xf32> to vector<8x1xf32>
    %21 = arith.maximumf %18, %20 : vector<8x1xf32>
    %22 = arith.subf %18, %21 : vector<8x1xf32>
    %23 = math.exp %22 : vector<8x1xf32>
    %24 = vector.broadcast %21 : vector<8x1xf32> to vector<8x32xf32>
    %25 = arith.subf %17, %24 : vector<8x32xf32>
    %26 = math.exp %25 : vector<8x32xf32>
    %c0_11 = arith.constant 0 : index
    %c0_12 = arith.constant 0 : index
    %27 = vector.load %arg6[%c0_11, %c0_12] : memref<8x1xf32, #tpu.memory_space<vmem>>, vector<8x1xf32>
    %28 = arith.mulf %23, %27 : vector<8x1xf32>
    %cst_13 = arith.constant dense<0.000000e+00> : vector<8xf32>
    %29 = vector.multi_reduction <add>, %26, %cst_13 [1] : vector<8x32xf32> to vector<8xf32>
    %30 = vector.shape_cast %29 : vector<8xf32> to vector<8x1xf32>
    %31 = arith.addf %28, %30 : vector<8x1xf32>
    %c0_14 = arith.constant 0 : index
    %c0_15 = arith.constant 0 : index
    %32 = vector.load %arg6[%c0_14, %c0_15] : memref<8x1xf32, #tpu.memory_space<vmem>>, vector<8x1xf32>
    tpu.vector_store %arg6[%c0_14, %c0_15], %31 {strides = array<i32>} : memref<8x1xf32, #tpu.memory_space<vmem>>, vector<8x1xf32>,
    %c0_16 = arith.constant 0 : index
    %c0_17 = arith.constant 0 : index
    %33 = vector.load %arg5[%c0_16, %c0_17] : memref<8x1xf32, #tpu.memory_space<vmem>>, vector<8x1xf32>
    tpu.vector_store %arg5[%c0_16, %c0_17], %21 {strides = array<i32>} : memref<8x1xf32, #tpu.memory_space<vmem>>, vector<8x1xf32>,
    %c0_18 = arith.constant 0 : index
    %c0_19 = arith.constant 0 : index
    %34 = vector.load %arg7[%c0_18, %c0_19] : memref<8x1xf32, #tpu.memory_space<vmem>>, vector<8x1xf32>
    %35 = vector.broadcast %9 : vector<8x1xi32> to vector<8x32xi32>
    %36 = arith.cmpi eq, %13, %35 : vector<8x32xi32>
    %cst_20 = arith.constant 0.000000e+00 : f32
    %37 = vector.broadcast %cst_20 : f32 to vector<8x32xf32>
    %38 = arith.select %36, %17, %37 : vector<8x32xi1>, vector<8x32xf32>
    %cst_21 = arith.constant dense<0.000000e+00> : vector<8xf32>
    %39 = vector.multi_reduction <add>, %38, %cst_21 [1] : vector<8x32xf32> to vector<8xf32>
    %40 = vector.shape_cast %39 : vector<8xf32> to vector<8x1xf32>
    %41 = arith.addf %34, %40 : vector<8x1xf32>
    %c0_22 = arith.constant 0 : index
    %c0_23 = arith.constant 0 : index
    %42 = vector.load %arg7[%c0_22, %c0_23] : memref<8x1xf32, #tpu.memory_space<vmem>>, vector<8x1xf32>
    tpu.vector_store %arg7[%c0_22, %c0_23], %41 {strides = array<i32>} : memref<8x1xf32, #tpu.memory_space<vmem>>, vector<8x1xf32>,
    %c0_i32_24 = arith.constant 0 : i32
    %43 = arith.cmpi eq, %arg1, %c0_i32_24 : i32
    %44 = arith.extui %43 : i1 to i32
    %c0_i32_25 = arith.constant 0 : i32
    %45 = arith.cmpi ne, %44, %c0_i32_25 : i32
    scf.if %45 {
      %c0_29 = arith.constant 0 : index
      %c0_30 = arith.constant 0 : index
      %51 = vector.load %arg5[%c0_29, %c0_30] : memref<8x1xf32, #tpu.memory_space<vmem>>, vector<8x1xf32>
      %c0_31 = arith.constant 0 : index
      %c0_32 = arith.constant 0 : index
      %52 = vector.load %arg6[%c0_31, %c0_32] : memref<8x1xf32, #tpu.memory_space<vmem>>, vector<8x1xf32>
      %53 = math.log %52 : vector<8x1xf32>
      %54 = arith.addf %51, %53 : vector<8x1xf32>
      %c0_33 = arith.constant 0 : index
      %c0_34 = arith.constant 0 : index
      %55 = vector.load %arg7[%c0_33, %c0_34] : memref<8x1xf32, #tpu.memory_space<vmem>>, vector<8x1xf32>
      %56 = arith.subf %54, %55 : vector<8x1xf32>
      %57 = tpu.iota {dimensions = array<i32: 0>} : vector<8x1xi32>
      %c8_i32 = arith.constant 8 : i32
      %58 = arith.muli %arg0, %c8_i32 : i32
      %59 = vector.broadcast %58 : i32 to vector<8x1xi32>
      %60 = arith.addi %57, %59 : vector<8x1xi32>
      %c8_i32_35 = arith.constant 8 : i32
      %61 = vector.broadcast %c8_i32_35 : i32 to vector<8x1xi32>
      %62 = arith.cmpi slt, %60, %61 : vector<8x1xi32>
      %cst_36 = arith.constant 0.000000e+00 : f32
      %63 = vector.broadcast %cst_36 : f32 to vector<8x1xf32>
      %64 = arith.select %62, %56, %63 : vector<8x1xi1>, vector<8x1xf32>
      %c0_37 = arith.constant 0 : index
      %c0_38 = arith.constant 0 : index
      %65 = vector.load %arg8[%c0_37, %c0_38] : memref<1x1xf32, #tpu.memory_space<vmem>>, vector<1x1xf32>
      %66 = vector.shape_cast %64 : vector<8x1xf32> to vector<1x8x1xf32>
      %cst_39 = arith.constant dense<0.000000e+00> : vector<1xf32>
      %67 = vector.multi_reduction <add>, %66, %cst_39 [1, 2] : vector<1x8x1xf32> to vector<1xf32>
      %68 = vector.shape_cast %67 : vector<1xf32> to vector<1x1x1xf32>
      %69 = vector.extract %68[0, 0, 0] : f32 from vector<1x1x1xf32>
      %70 = vector.broadcast %69 : f32 to vector<1x1xf32>
      %71 = arith.addf %65, %70 : vector<1x1xf32>
      %c0_40 = arith.constant 0 : index
      %c0_41 = arith.constant 0 : index
      %72 = vector.load %arg8[%c0_40, %c0_41] : memref<1x1xf32, #tpu.memory_space<vmem>>, vector<1x1xf32>
      tpu.vector_store %arg8[%c0_40, %c0_41], %71 {strides = array<i32>} : memref<1x1xf32, #tpu.memory_space<vmem>>, vector<1x1xf32>,
    } else {
    }
    %c0_i32_26 = arith.constant 0 : i32
    %46 = arith.cmpi eq, %arg0, %c0_i32_26 : i32
    %c0_i32_27 = arith.constant 0 : i32
    %47 = arith.cmpi eq, %arg1, %c0_i32_27 : i32
    %48 = arith.andi %46, %47 : i1
    %49 = arith.extui %48 : i1 to i32
    %c0_i32_28 = arith.constant 0 : i32
    %50 = arith.cmpi ne, %49, %c0_i32_28 : i32
    scf.if %50 {
      %c0_29 = arith.constant 0 : index
      %c0_30 = arith.constant 0 : index
      %51 = vector.load %arg8[%c0_29, %c0_30] : memref<1x1xf32, #tpu.memory_space<vmem>>, vector<1x1xf32>
      %cst_31 = arith.constant 8.000000e+00 : f32
      %52 = vector.broadcast %cst_31 : f32 to vector<1x1xf32>
      %53 = arith.divf %51, %52 : vector<1x1xf32>
      %c0_32 = arith.constant 0 : index
      %c0_33 = arith.constant 0 : index
      %54 = vector.load %arg4[%c0_32, %c0_33] : memref<1x1xf32, #tpu.memory_space<vmem>>, vector<1x1xf32>
      tpu.vector_store %arg4[%c0_32, %c0_33], %53 {strides = array<i32>} : memref<1x1xf32, #tpu.memory_space<vmem>>, vector<1x1xf32>,
    } else {
    }
    return
  }
  func.func @transform_0(%arg0: i32, %arg1: i32) -> (i32, i32) {
    %c0_i32 = arith.constant 0 : i32
    return %arg0, %arg1 : i32, i32
  }
  func.func @transform_1(%arg0: i32, %arg1: i32) -> (i32, i32) {
    %c0_i32 = arith.constant 0 : i32
    %c0_i32_0 = arith.constant 0 : i32
    return %arg0, %c0_i32 : i32, i32
  }
  func.func @transform_2(%arg0: i32, %arg1: i32) -> (i32, i32) {
    %c0_i32 = arith.constant 0 : i32
    %c0_i32_0 = arith.constant 0 : i32
    %c0_i32_1 = arith.constant 0 : i32
    return %c0_i32, %c0_i32_0 : i32, i32
  }
}

</mosaic_0001>

<llo_original>
// kernel: tpu_custom_call.1
$region0: #{tpu_custom_call.1}
  #allocation0 [shape = 'u32[]', space=smem, size = 0x4, offset = 0x4, fixed_abs, tag = 'smem constant byte address 0x4 - core index']
  #allocation1 [shape = 'u32[72,128]{1,0:T(1,128)}', space=vmem, size = 0x9000, scoped, tag = 'internal scratch']
  #allocation2 [shape = 'f32[8,1]{1,0:T(8,128)}', space=vmem, size = 0x1000, scoped, tag = 'scratch operand']
  #allocation3 [shape = 'f32[8,1]{1,0:T(8,128)}', space=vmem, size = 0x1000, scoped, tag = 'scratch operand']
  #allocation4 [shape = 'f32[8,1]{1,0:T(8,128)}', space=vmem, size = 0x1000, scoped, tag = 'scratch operand']
  #allocation5 [shape = 'f32[1,1]{1,0:T(1,128)}', space=vmem, size = 0x200, scoped, tag = 'scratch operand']
  %s0 = inlined_call_operand.vmem [shape: f32[8,32], index: 0, kind: input, shape index: {}]
  %s1 = inlined_call_operand.vmem [shape: s32[8,1], index: 1, kind: input, shape index: {}]
  %s2 = inlined_call_operand.hbm [shape: f32[1,1], index: 2, kind: output, shape index: {}]
  %s3 = sld [smem:[#allocation0]]
  $region34: #{tpu_custom_call.1} parent=0
    _
  %s5 = ssub.s32 1, %s3
  %s6 = scalar_select 0, %s5, %s3
  $region1: #{tpu_custom_call.1} parent=0
    #allocation6 [shape = 'u8[512]{0}', space=vmem, size = 0x400, scoped, tag = 'output window, operand 0, single buffered']
    #allocation7 [shape = 's32[1]{0}', space=sflag, size = 0x4, scoped, tag = 'scoped memory for tpu_custom_call.1']
    %7 = vsyncpa [#allocation7], 0
    // Predicated region
    $region2: #{tpu_custom_call.1} parent=1 // pred_check
      _
    $region3: #{tpu_custom_call.1} parent=1 // pred_check_branch
      %9 = sbr.rel (0) target = $region5
    $region4: #{tpu_custom_call.1} parent=1 // pred_region
      _
    $region5: #{tpu_custom_call.1} parent=1 // pred_fallthru
      _
    // Predicated region
    $region6: #{tpu_custom_call.1} parent=1 // pred_check
      _
    $region7: #{tpu_custom_call.1} parent=1 // pred_check_branch
      %11 = sbr.rel (0) target = $region9
    $region8: #{tpu_custom_call.1} parent=1 // pred_region
      _
    $region9: #{tpu_custom_call.1} parent=1 // pred_fallthru
      _
    %p12 = scmp.eq.s32.totalorder 0, 0
    %p13 = scmp.eq.s32.totalorder 0, 0
    %p14 = pnand %p12, %p13
    %p15 = pneg %p14
    // Predicated region
    $region10: #{tpu_custom_call.1} parent=1 // pred_check
      _
    $region11: #{tpu_custom_call.1} parent=1 // pred_check_branch
      %17 = sbr.rel (%p14) target = $region13
    $region12: #{tpu_custom_call.1} parent=1 // pred_region
      %vm18 = vcmask 0
      %19 = vst.msk [vmem:[#allocation5] sm:$0x1] %vm18, 0.0
    $region13: #{tpu_custom_call.1} parent=1 // pred_fallthru
      _
    // Predicated region
    $region14: #{tpu_custom_call.1} parent=1 // pred_check
      %p20 = pneg %p13
    $region15: #{tpu_custom_call.1} parent=1 // pred_check_branch
      %22 = sbr.rel (%p20) target = $region17
    $region16: #{tpu_custom_call.1} parent=1 // pred_region
      %vm23 = vcmask 7168
      %24 = vst.msk [vmem:[#allocation2] sm:$0xff] %vm23, -inf
      %25 = vst.msk [vmem:[#allocation3] sm:$0xff] %vm23, 0.0
      %26 = vst.msk [vmem:[#allocation4] sm:$0xff] %vm23, 0.0
    $region17: #{tpu_custom_call.1} parent=1 // pred_fallthru
      _
    %v27 = vld [vmem:[%s0] sm:$0xff]
    %v28 = vld [vmem:[%s1] sm:$0xff]
    %v29 = vlaneseq
    %v30 = vand.u32 %v29, 127
    %s31 = smul.u32 0, 32
    %v32 = vstv %s31
    %v33 = vadd.s32 %v30, %v32
    %vm34 = vcmp.lt.s32.totalorder %v33, 32
    %v35 = vsel %vm34, %v27, -inf
    %v36 = vld [vmem:[#allocation2] sm:$0xff]
    %vm37 = vcmask 261120
    %v38 = vsel %vm37, %v35, -inf
    %39 = vmax.xlane.f32.xlu0 %v38
    %v40 = vpop.xlane.xlu0 %39
    %v41 = vmax.f32 %v36, %v40
    %v42 = vsub.f32 %v36, %v41
    %v43 = vmul.f32 %v42, 1.442695
    %v44 = vpow.pop %v43
    %46 = vset.pattern.permute.xlu0 0
    %47 = vperm.xlu0 %46, %v41
    %v48 = vpop.permute.xlu0 %47
    %v50 = vsub.f32 %v35, %v48
    %v51 = vmul.f32 %v50, 1.442695
    %v52 = vpow.pop %v51
    %v53 = vld [vmem:[#allocation3] sm:$0xff]
    %v54 = vmul.f32 %v44, %v53
    %v55 = vsel %vm37, %v52, 0.0
    %56 = vadd.xlane.f32.xlu0 %v55
    %v57 = vpop.xlane.xlu0 %56
    %v58 = vadd.f32 %v54, %v57
    %vm59 = vcmask 7168
    %60 = vst.msk [vmem:[#allocation3] sm:$0xff] %vm59, %v58
    %61 = vst.msk [vmem:[#allocation2] sm:$0xff] %vm59, %v41
    %v62 = vld [vmem:[#allocation4] sm:$0xff]
    %63 = vset.pattern.permute.xlu0 0
    %64 = vperm.xlu0 %63, %v28
    %v65 = vpop.permute.xlu0 %64
    %vm66 = vcmp.eq.s32.totalorder %v33, %v65
    %v67 = vsel %vm66, %v35, 0.0
    %v68 = vsel %vm37, %v67, 0.0
    %69 = vadd.xlane.f32.xlu0 %v68
    %v70 = vpop.xlane.xlu0 %69
    %v71 = vadd.f32 %v62, %v70
    %72 = vst.msk [vmem:[#allocation4] sm:$0xff] %vm59, %v71
    // Predicated region
    $region18: #{tpu_custom_call.1} parent=1 // pred_check
      %p73 = pneg %p13
    $region19: #{tpu_custom_call.1} parent=1 // pred_check_branch
      %75 = sbr.rel (%p73) target = $region21
    $region20: #{tpu_custom_call.1} parent=1 // pred_region
      %v76 = vld [vmem:[#allocation2] sm:$0xff]
      %v77 = vld [vmem:[#allocation3] sm:$0xff]
      %v78 = vlog2.pop %v77
      %v79 = vmul.f32 %v78, 0.6931472
      %v80 = vadd.f32 %v76, %v79
      %v81 = vld [vmem:[#allocation4] sm:$0xff]
      %v82 = vsub.f32 %v80, %v81
      %v83 = vlaneseq
      %v84 = vshrl.u32 %v83, 7
      %s85 = smul.u32 0, 8
      %v86 = vstv %s85
      %v87 = vadd.s32 %v84, %v86
      %vm88 = vcmp.lt.s32.totalorder %v87, 8
      %v89 = vsel %vm88, %v82, 0.0
      %v90 = vld [vmem:[#allocation5] sm:$0x1]
      %v91 = vsel %vm59, %v89, 0.0
      %92 = vadd.xlane.f32.xlu0 %v91
      %v93 = vpop.xlane.xlu0 %92
      %v94 = vrot.slane %v93, 4
      %v95 = vadd.f32 %v93, %v94
      %v96 = vrot.slane %v95, 2
      %v97 = vadd.f32 %v95, %v96
      %v98 = vrot.slane %v97, 1
      %v99 = vadd.f32 %v97, %v98
      %s100 = vtos %v99
      %v101 = vstv %s100
      %v102 = vadd.f32 %v90, %v101
      %vm103 = vcmask 0
      %104 = vst.msk [vmem:[#allocation5] sm:$0x1] %vm103, %v102
    $region21: #{tpu_custom_call.1} parent=1 // pred_fallthru
      _
    // Predicated region
    $region22: #{tpu_custom_call.1} parent=1 // pred_check
      _
    $region23: #{tpu_custom_call.1} parent=1 // pred_check_branch
      %106 = sbr.rel (%p14) target = $region25
    $region24: #{tpu_custom_call.1} parent=1 // pred_region
      %v107 = vld [vmem:[#allocation5] sm:$0x1]
      %v108 = vrcp.pop 8.0
      %v109 = vmul.f32 8.0, %v108
      %v110 = vsub.f32 1.0, %v109
      %v111 = vmul.f32 %v108, %v110
      %v112 = vadd.f32 %v108, %v111
      %vm113 = vweird.f32 %v108
      %v114 = vsel %vm113, %v108, %v112
      %v115 = vmul.f32 %v107, %v114
      %vm116 = vcmask 0
      %117 = vst.msk [vmem:[#allocation6] sm:$0x1] %vm116, %v115
    $region25: #{tpu_custom_call.1} parent=1 // pred_fallthru
      _
    // Predicated region
    $region26: #{tpu_custom_call.1} parent=1 // pred_check
      _
    $region27: #{tpu_custom_call.1} parent=1 // pred_check_branch
      %119 = sbr.rel (0) target = $region29
    $region28: #{tpu_custom_call.1} parent=1 // pred_region
      %121 = vsyncadd [#allocation7], 0
      %s123 = sshll.u32 [#allocation6], 4
      %s124 = int_to_ptr.vmem [resolvable:$true] %s123
      %s125 = sshll.u32 %s2, 4
      %s126 = int_to_ptr.hbm [resolvable:$true] %s125
      %128 = dma.vmem_to_hbm [thread:$0]  %s124, 16, %s126, [#allocation7]
    $region29: #{tpu_custom_call.1} parent=1 // pred_fallthru
      _
    // Predicated region
    $region30: #{tpu_custom_call.1} parent=1 // pred_check
      _
    $region31: #{tpu_custom_call.1} parent=1 // pred_check_branch
      %130 = sbr.rel (0) target = $region33
    $region32: #{tpu_custom_call.1} parent=1 // pred_region
      %132 = dma.done [#allocation7], 16
    $region33: #{tpu_custom_call.1} parent=1 // pred_fallthru
      _
    %133 = vsyncpa [#allocation7], 1

</llo_original>
